<compile_context>
chip_gen: v6e
topology: v6e:2x2x1
jax: 0.10.0
libtpu: 0.0.40
codegen_flags: <defaults>
</compile_context>

<pallas_src>
import math

import jax
import jax.numpy as jnp
from jax.experimental import pallas as pl
from jax.experimental.pallas import tpu as pltpu


def _pe_add_kernel_mxu(x_ref, e_ref, pe_ref, o_ref):
    # x_ref : (TS, B)     f32 position tile (S on sublanes, B on lanes)
    # e_ref : (B, DBp)    f32 0/1 expansion matrix, E[b, d*B + b] = 1 (0 in pad lanes)
    # pe_ref: (1, DBp)    f32 flattened pe, pe_flat[0, d*B + b] = pe[b, d] (0 in pad)
    # o_ref : (TS, DBp)   output tile; first D*B lanes row-major identical to (TS, D, B)
    o_ref[...] = (
        jnp.dot(x_ref[...], e_ref[...], preferred_element_type=jnp.float32)
        + pe_ref[...]
    ).astype(o_ref.dtype)


def _pe_add_kernel_vpu(x_ref, e_ref, pe_ref, o_ref):
    # Exact fallback for tiny batch (B <= 2): per batch column one lane-broadcast
    # multiply by the 0/1 row of E plus one add (x*1 and x*0 are exact in f32,
    # so the result is bit-identical to the torch f32 add).  pe is added once.
    x = x_ref[...]                       # (TS, B)
    acc = pe_ref[...]                    # (1, DBp) -> broadcasts over sublanes
    for b in range(x.shape[1]):          # trace-time unroll, only used for B <= 2
        acc = acc + x[:, b:b + 1] * e_ref[b:b + 1, :]
    o_ref[...] = acc.astype(o_ref.dtype)


def _pick_tile_rows(S, lane_width, elem_bytes=4, target_tile_bytes=4 * 1024 * 1024):
    """~4 MiB output tiles: big enough for near-roofline HBM stores, small enough
    that double-buffering (~2x) plus the tiny resident inputs stays well under
    the scoped-VMEM default on every generation (v5e 16 MiB, v6e/v7x 32 MiB)."""
    rows = max(8, target_tile_bytes // max(1, lane_width * elem_bytes))
    if S <= rows:
        return S                       # single full-extent block (always legal)
    return max(8, int(rows // 8) * 8)  # multiple of 8 keeps the (8,128) rule happy


class PositionEmbeddingFixedV0:
    """JAX/Pallas port of PositionEmbeddingFixed_v0 (eval mode)."""

    def __init__(self, num_pos_dict, d_model, dropout=0.1, max_len=5000):
        del num_pos_dict  # unused by the torch module as well
        self.d_model = d_model
        self.dropout_p = dropout  # dropout is identity in eval mode
        # Deterministic buffer construction, identical to the torch __init__:
        position = jnp.arange(0, max_len, dtype=jnp.float32)[:, None]          # [max_len, 1]
        div_term = jnp.exp(
            jnp.arange(0, d_model, 2, dtype=jnp.float32)
            * (-math.log(10000.0) / d_model)
        )                                                                        # [d_model//2]
        pe = jnp.zeros((max_len, d_model), dtype=jnp.float32)
        pe = pe.at[:, 0::2].set(jnp.sin(position * div_term))
        pe = pe.at[:, 1::2].set(jnp.cos(position * div_term))
        # registered buffer shape in torch: [max_len, 1, d_model]
        self.pe = pe[:, None, :]

    def __call__(self, x, mask=None, *, max_tile_rows=None, out_dtype=jnp.float32):
        # x: [S, B] float positions; mask is unused (kept for signature parity)
        del mask
        S, B = x.shape
        D = self.d_model
        if B > self.pe.shape[0]:
            raise ValueError(
                f"batch ({B}) exceeds max_len ({self.pe.shape[0]}); the torch "
                "module's pe[:x.size(0)] slice would be short and its add would fail.")
        DB = D * B
        DBp = max(128, ((DB + 127) // 128) * 128)   # lane-dense / unmasked-store guard

        # Tiny per-call precomputes (wrapper-side glue, O(B*D) data).
        x32 = x.astype(jnp.float32)                              # [S, B], untransposed
        pe_b = self.pe[:B, 0, :]                                 # [B, D] (== pe[:x.size(0)])
        pe_flat = jnp.zeros((1, DBp), jnp.float32).at[0, :DB].set(
            jnp.transpose(pe_b, (1, 0)).reshape(DB))             # pe_flat[0, d*B+b] = pe[b, d]
        lane = jnp.arange(DBp, dtype=jnp.int32)
        e_mat = (((lane[None, :] % B) == jnp.arange(B, dtype=jnp.int32)[:, None])
                 & (lane[None, :] < DB)).astype(jnp.float32)     # (B, DBp) 0/1 expansion

        elem_bytes = max(jnp.dtype(out_dtype).itemsize, 4)
        ts = _pick_tile_rows(S, DBp, elem_bytes=elem_bytes)
        if max_tile_rows is not None:
            ts = min(ts, max(8, (int(max_tile_rows) // 8) * 8))
        if ts >= S:
            ts = S
        grid = (pl.cdiv(S, ts),)

        # MXU expansion for B > 2 (idle unit -> kernel becomes pure store-bound);
        # exact VPU multiply-accumulate for tiny batch.
        kernel = _pe_add_kernel_mxu if B > 2 else _pe_add_kernel_vpu

        out_flat = pl.pallas_call(
            kernel,
            out_shape=jax.ShapeDtypeStruct((S, DBp), out_dtype),
            grid=grid,
            in_specs=[
                pl.BlockSpec((ts, B), lambda i: (i, 0)),     # x tile, S on sublanes
                pl.BlockSpec((B, DBp), lambda i: (0, 0)),    # expansion matrix (resident)
                pl.BlockSpec((1, DBp), lambda i: (0, 0)),    # flattened pe     (resident)
            ],
            out_specs=pl.BlockSpec((ts, DBp), lambda i: (i, 0)),
            compiler_params=pltpu.CompilerParams(
                # TODO(synk): verify in an xprof profile that "parallel" actually
                # shards the S grid over v7x's 2 TensorCores; fall back to
                # pltpu.CORE_PARALLEL if only one TC streams.
                dimension_semantics=("parallel",),
                vmem_limit_bytes=32 * 1024 * 1024),
        )(x32, e_mat, pe_flat)

        # Row-major [S, D*B] is bit-identical to [S, D, B]; drop lane padding (no-op
        # when D*B is already a multiple of 128).
        if DBp != DB:
            out_flat = out_flat[:, :DB]
        out = out_flat.reshape(S, D, B)
        # TODO(synk): training-mode dropout (p=0.1) not implemented; eval-mode identity.
        return out


def _reference(x, pe_buf):
    """Pure-JAX reference mirroring the torch forward exactly."""
    S, B = x.shape
    xb = jnp.transpose(x, (1, 0))[:, :, None]              # [B, S, 1]
    pe = jnp.repeat(pe_buf[:B, :, :], S, axis=1)            # [B, S, D]
    out = xb + pe                                            # [B, S, D]
    return jnp.transpose(out, (1, 2, 0))                     # [S, D, B]


if __name__ == "__main__":
    # Case 1: tiny batch -> exact VPU fallback path, padded lanes (D*B = 64 -> 128).
    S, B, D = 8, 2, 32
    key = jax.random.PRNGKey(0)
    x = jax.random.normal(key, (S, B), dtype=jnp.float32)    # positions fed to the encoder
    mask = jnp.zeros((S, B), dtype=jnp.bool_)                 # unused, signature parity

    module = PositionEmbeddingFixedV0(num_pos_dict=None, d_model=D, dropout=0.1, max_len=64)
    out = jax.block_until_ready(module(x, mask))
    ref = _reference(x, module.pe)
    assert out.shape == (S, D, B), out.shape
    assert jnp.allclose(out, ref, atol=1e-6, rtol=1e-6), "mismatch vs reference (VPU path)"

    # Case 2: MXU expansion path, lane-dense output (D*B = 256), multi-tile pipelined grid.
    S2, B2, D2 = 48, 4, 64
    module2 = PositionEmbeddingFixedV0(num_pos_dict=None, d_model=D2, dropout=0.1, max_len=64)
    x2 = jax.random.normal(jax.random.PRNGKey(1), (S2, B2), dtype=jnp.float32)
    out2 = jax.block_until_ready(module2(x2, None, max_tile_rows=16))  # 3 S-tiles of 16 rows
    ref2 = _reference(x2, module2.pe)
    assert out2.shape == (S2, D2, B2), out2.shape
    assert jnp.allclose(out2, ref2, atol=1e-5, rtol=1e-5), "mismatch vs reference (MXU path)"

    print("KERNEL_OK")
</pallas_src>

<mosaic_0001>
module attributes {stable_mosaic.version = 11 : i64} {
  func.func @_pe_add_kernel_vpu(%arg0: i32, %arg1: memref<8x2xf32, #tpu.memory_space<vmem>>, %arg2: memref<2x128xf32, #tpu.memory_space<vmem>>, %arg3: memref<1x128xf32, #tpu.memory_space<vmem>>, %arg4: memref<8x128xf32, #tpu.memory_space<vmem>>) attributes {dimension_semantics = [#tpu.dimension_semantics<parallel>], iteration_bounds = array<i64: 1>, scalar_prefetch = 0 : i64, scratch_operands = 0 : i64, tpu.core_type = #tpu.core_type<tc>, window_params = [{transform_indices = @transform_0, window_bounds = array<i64: 8, 2>}, {pipeline_mode = #tpu.pipeline_mode<synchronous>, transform_indices = @transform_1, window_bounds = array<i64: 2, 128>}, {pipeline_mode = #tpu.pipeline_mode<synchronous>, transform_indices = @transform_2, window_bounds = array<i64: 1, 128>}, {transform_indices = @transform_3, window_bounds = array<i64: 8, 128>}]} {
    %c0 = arith.constant 0 : index
    %c0_0 = arith.constant 0 : index
    %0 = vector.load %arg1[%c0, %c0_0] : memref<8x2xf32, #tpu.memory_space<vmem>>, vector<8x2xf32>
    %c0_1 = arith.constant 0 : index
    %c0_2 = arith.constant 0 : index
    %1 = vector.load %arg3[%c0_1, %c0_2] : memref<1x128xf32, #tpu.memory_space<vmem>>, vector<1x128xf32>
    %2 = vector.extract_strided_slice %0 {offsets = [0, 0], sizes = [8, 1], strides = [1, 1]} : vector<8x2xf32> to vector<8x1xf32>
    %c0_3 = arith.constant 0 : index
    %c0_4 = arith.constant 0 : index
    %3 = vector.load %arg2[%c0_3, %c0_4] : memref<2x128xf32, #tpu.memory_space<vmem>>, vector<1x128xf32>
    %4 = vector.broadcast %2 : vector<8x1xf32> to vector<8x128xf32>
    %5 = vector.broadcast %3 : vector<1x128xf32> to vector<8x128xf32>
    %6 = arith.mulf %4, %5 : vector<8x128xf32>
    %7 = vector.broadcast %1 : vector<1x128xf32> to vector<8x128xf32>
    %8 = arith.addf %7, %6 : vector<8x128xf32>
    %9 = vector.extract_strided_slice %0 {offsets = [0, 1], sizes = [8, 1], strides = [1, 1]} : vector<8x2xf32> to vector<8x1xf32>
    %c1 = arith.constant 1 : index
    %c0_5 = arith.constant 0 : index
    %10 = vector.load %arg2[%c1, %c0_5] : memref<2x128xf32, #tpu.memory_space<vmem>>, vector<1x128xf32>
    %11 = vector.broadcast %9 : vector<8x1xf32> to vector<8x128xf32>
    %12 = vector.broadcast %10 : vector<1x128xf32> to vector<8x128xf32>
    %13 = arith.mulf %11, %12 : vector<8x128xf32>
    %14 = arith.addf %8, %13 : vector<8x128xf32>
    %c0_6 = arith.constant 0 : index
    %c0_7 = arith.constant 0 : index
    %15 = vector.load %arg4[%c0_6, %c0_7] : memref<8x128xf32, #tpu.memory_space<vmem>>, vector<8x128xf32>
    tpu.vector_store %arg4[%c0_6, %c0_7], %14 {strides = array<i32>} : memref<8x128xf32, #tpu.memory_space<vmem>>, vector<8x128xf32>,
    return
  }
  func.func @transform_0(%arg0: i32) -> (i32, i32) {
    %c0_i32 = arith.constant 0 : i32
    %c0_i32_0 = arith.constant 0 : i32
    return %arg0, %c0_i32 : i32, i32
  }
  func.func @transform_1(%arg0: i32) -> (i32, i32) {
    %c0_i32 = arith.constant 0 : i32
    %c0_i32_0 = arith.constant 0 : i32
    %c0_i32_1 = arith.constant 0 : i32
    return %c0_i32, %c0_i32_0 : i32, i32
  }
  func.func @transform_2(%arg0: i32) -> (i32, i32) {
    %c0_i32 = arith.constant 0 : i32
    %c0_i32_0 = arith.constant 0 : i32
    %c0_i32_1 = arith.constant 0 : i32
    return %c0_i32, %c0_i32_0 : i32, i32
  }
  func.func @transform_3(%arg0: i32) -> (i32, i32) {
    %c0_i32 = arith.constant 0 : i32
    %c0_i32_0 = arith.constant 0 : i32
    return %arg0, %c0_i32 : i32, i32
  }
}

</mosaic_0001>

<llo_original>
// kernel: tpu_custom_call.1
$region0: #{tpu_custom_call.1}
  #allocation0 [shape = 'u32[]', space=smem, size = 0x4, offset = 0x4, fixed_abs, tag = 'smem constant byte address 0x4 - core index']
  #allocation1 [shape = 'u32[144,128]{1,0:T(1,128)}', space=vmem, size = 0x12000, scoped, tag = 'internal scratch']
  %s0 = inlined_call_operand.vmem [shape: f32[8,2], index: 0, kind: input, shape index: {}]
  %s1 = inlined_call_operand.vmem [shape: f32[2,128], index: 1, kind: input, shape index: {}]
  %s2 = inlined_call_operand.vmem [shape: f32[1,128], index: 2, kind: input, shape index: {}]
  %s3 = inlined_call_operand.hbm [shape: f32[8,128], index: 3, kind: output, shape index: {}]
  %s4 = sld [smem:[#allocation0]]
  $region22: #{tpu_custom_call.1} parent=0
    _
  %s6 = ssub.s32 1, %s4
  %s7 = scalar_select 0, %s6, %s4
  $region1: #{tpu_custom_call.1} parent=0
    #allocation2 [shape = 'u8[4096]{0}', space=vmem, size = 0x1000, scoped, tag = 'output window, operand 0, single buffered']
    #allocation3 [shape = 's32[1]{0}', space=sflag, size = 0x4, scoped, tag = 'scoped memory for tpu_custom_call.1']
    %8 = vsyncpa [#allocation3], 0
    // Predicated region
    $region2: #{tpu_custom_call.1} parent=1 // pred_check
      _
    $region3: #{tpu_custom_call.1} parent=1 // pred_check_branch
      %10 = sbr.rel (0) target = $region5
    $region4: #{tpu_custom_call.1} parent=1 // pred_region
      _
    $region5: #{tpu_custom_call.1} parent=1 // pred_fallthru
      _
    // Predicated region
    $region6: #{tpu_custom_call.1} parent=1 // pred_check
      _
    $region7: #{tpu_custom_call.1} parent=1 // pred_check_branch
      %12 = sbr.rel (0) target = $region9
    $region8: #{tpu_custom_call.1} parent=1 // pred_region
      _
    $region9: #{tpu_custom_call.1} parent=1 // pred_fallthru
      _
    // Predicated region
    $region10: #{tpu_custom_call.1} parent=1 // pred_check
      _
    $region11: #{tpu_custom_call.1} parent=1 // pred_check_branch
      %14 = sbr.rel (0) target = $region13
    $region12: #{tpu_custom_call.1} parent=1 // pred_region
      _
    $region13: #{tpu_custom_call.1} parent=1 // pred_fallthru
      _
    %v15 = vld [vmem:[%s0] sm:$0xff]
    %v16 = vld [vmem:[%s2] sm:$0x1]
    %v17 = vld [vmem:[%s1] sm:$0x1]
    %19 = vset.pattern.permute.xlu0 0
    %20 = vperm.xlu0 %19, %v15
    %v21 = vpop.permute.xlu0 %20
    %v23 = vlaneseq
    %v24 = vshrl.u32 %v23, 7
    %v25 = vsub.s32 0, %v24
    %v26 = vrot.slane %v17, %v25
    %v27 = vmul.f32 %v21, %v26
    %v29 = vlaneseq
    %v30 = vshrl.u32 %v29, 7
    %v31 = vsub.s32 0, %v30
    %v32 = vrot.slane %v16, %v31
    %v34 = vadd.f32 %v32, %v27
    %v35 = vld [vmem:[%s1 + $0x1] sm:$0x1]
    %36 = vset.pattern.permute.xlu0 1
    %37 = vperm.xlu0 %36, %v15
    %v38 = vpop.permute.xlu0 %37
    %v40 = vlaneseq
    %v41 = vshrl.u32 %v40, 7
    %v42 = vsub.s32 0, %v41
    %v43 = vrot.slane %v35, %v42
    %v44 = vmul.f32 %v38, %v43
    %v45 = vadd.f32 %v34, %v44
    %46 = vst [vmem:[#allocation2] sm:$0xff] %v45
    // Predicated region
    $region14: #{tpu_custom_call.1} parent=1 // pred_check
      _
    $region15: #{tpu_custom_call.1} parent=1 // pred_check_branch
      %48 = sbr.rel (0) target = $region17
    $region16: #{tpu_custom_call.1} parent=1 // pred_region
      %s50 = ssub.s32 128, 128
      %51 = vsyncadd [#allocation3], %s50
      %s53 = sshll.u32 [#allocation2], 4
      %s54 = int_to_ptr.vmem [resolvable:$true] %s53
      %56 = dma.vmem_to_hbm [thread:$0]  %s54, 128, %s3, [#allocation3]
    $region17: #{tpu_custom_call.1} parent=1 // pred_fallthru
      _
    // Predicated region
    $region18: #{tpu_custom_call.1} parent=1 // pred_check
      _
    $region19: #{tpu_custom_call.1} parent=1 // pred_check_branch
      %58 = sbr.rel (0) target = $region21
    $region20: #{tpu_custom_call.1} parent=1 // pred_region
      %59 = dma.done [#allocation3], 128
    $region21: #{tpu_custom_call.1} parent=1 // pred_fallthru
      _
    %60 = vsyncpa [#allocation3], 1

</llo_original>
